<compile_context>
chip_gen: v7x
topology: tpu7x:2x2x1
jax: 0.10.0
libtpu: 0.0.40
codegen_flags: <defaults>
</compile_context>

<pallas_src>
import jax
import jax.numpy as jnp
from jax.experimental import pallas as pl
from jax.experimental.pallas import tpu as pltpu


def adj_encoder_kernel(l_ref, r_ref, wl_ref, wr_ref, bl_ref, ws_ref, bs_ref, o_ref):
    """One batch tile: two layer-1 dots + bias + tanh, layer-2 dot + bias + tanh."""
    mm_dtype = wl_ref.dtype
    # Cast activations to the matmul operand dtype inside the kernel (no extra
    # HBM pass; a no-op when mm_dtype == input dtype).  f32 accumulation always.
    l = l_ref[...].astype(mm_dtype)
    r = r_ref[...].astype(mm_dtype)
    h = jnp.dot(l, wl_ref[...], preferred_element_type=jnp.float32)
    h = h + jnp.dot(r, wr_ref[...], preferred_element_type=jnp.float32)
    h = jnp.tanh(h + bl_ref[...])                       # bias + tanh in f32
    y = jnp.dot(h.astype(mm_dtype), ws_ref[...],
                preferred_element_type=jnp.float32)
    o_ref[...] = jnp.tanh(y + bs_ref[...]).astype(o_ref.dtype)


def _round_up(x, m):
    return ((x + m - 1) // m) * m


def prepare_params(params, *, mm_dtype=jnp.float32):
    """One-time parameter prep (cache the result across calls).

    Weights are stored pre-transposed as [in, out]; biases are kept in f32 and
    reshaped to [1, dim] so they broadcast over the batch tile inside the kernel.
    """
    return {
        "wl": params["wl"].astype(mm_dtype),
        "wr": params["wr"].astype(mm_dtype),
        "ws": params["ws"].astype(mm_dtype),
        "bl": params["bl"].reshape(1, -1).astype(jnp.float32),
        "bs": params["bs"].reshape(1, -1).astype(jnp.float32),
    }


def adj_encoder(left_input, right_input, prepped, *, tb=None, out_dtype=None):
    """left_input / right_input: [B, F].  `prepped` = prepare_params(params).

    Returns [B, F] in `out_dtype` (defaults to the input dtype).
    """
    B, F = left_input.shape
    H = prepped["wl"].shape[1]
    if out_dtype is None:
        out_dtype = left_input.dtype

    # ---- batch tile selection ------------------------------------------------
    if tb is None:
        if B <= 32:
            tb = B                                   # tiny batch: single step
        else:
            # Big tiles for HBM BW / low per-step overhead, but guarantee >= 2
            # grid steps so v7x's two TensorCores both get a share of the batch.
            tb = min(1024, _round_up(pl.cdiv(B, 2), 16))
    else:
        tb = _round_up(tb, 16)                       # bf16 sublane packing
    tb = min(tb, B)

    grid = (pl.cdiv(B, tb),)

    # Batch-tiled activations; all weights/biases resident (index_map -> (0, 0)).
    in_specs = [
        pl.BlockSpec((tb, F), lambda i: (i, 0)),     # left  tile
        pl.BlockSpec((tb, F), lambda i: (i, 0)),     # right tile
        pl.BlockSpec((F, H), lambda i: (0, 0)),      # Wl
        pl.BlockSpec((F, H), lambda i: (0, 0)),      # Wr
        pl.BlockSpec((1, H), lambda i: (0, 0)),      # bl
        pl.BlockSpec((H, F), lambda i: (0, 0)),      # Ws
        pl.BlockSpec((1, F), lambda i: (0, 0)),      # bs
    ]

    return pl.pallas_call(
        adj_encoder_kernel,
        out_shape=jax.ShapeDtypeStruct((B, F), out_dtype),
        grid_spec=pltpu.PrefetchScalarGridSpec(
            num_scalar_prefetch=0,
            grid=grid,
            in_specs=in_specs,
            out_specs=pl.BlockSpec((tb, F), lambda i: (i, 0)),
        ),
        compiler_params=pltpu.CompilerParams(
            dimension_semantics=("parallel",)),
    )(left_input, right_input, prepped["wl"], prepped["wr"], prepped["bl"],
      prepped["ws"], prepped["bs"])


def init_params(key, feature_size, hidden_size, dtype=jnp.float32):
    """Deterministic init mimicking nn.Linear default (uniform +-1/sqrt(fan_in)).
       Weights are stored pre-transposed as [in, out]."""
    k1, k2, k3, k4, k5 = jax.random.split(key, 5)
    s1 = 1.0 / (feature_size ** 0.5)
    s2 = 1.0 / (hidden_size ** 0.5)
    return {
        "wl": jax.random.uniform(k1, (feature_size, hidden_size), dtype, -s1, s1),
        "bl": jax.random.uniform(k2, (1, hidden_size), dtype, -s1, s1),
        "wr": jax.random.uniform(k3, (feature_size, hidden_size), dtype, -s1, s1),
        "ws": jax.random.uniform(k4, (hidden_size, feature_size), dtype, -s2, s2),
        "bs": jax.random.uniform(k5, (1, feature_size), dtype, -s2, s2),
    }


def adj_encoder_ref(left_input, right_input, params):
    h = jnp.tanh(left_input @ params["wl"] + params["bl"]
                 + right_input @ params["wr"])
    return jnp.tanh(h @ params["ws"] + params["bs"])


if __name__ == "__main__":
    # NOTE: in the real GRASS workload, batch all node-pair evaluations of a tree
    # level into one adj_encoder call (stack on B) rather than calling per node,
    # and reuse `prepped` across every call.
    batch, feature_size, hidden_size = 8, 32, 64

    key = jax.random.PRNGKey(0)
    k_l, k_r, k_p = jax.random.split(key, 3)
    left_input = jax.random.normal(k_l, (batch, feature_size), jnp.float32)
    right_input = jax.random.normal(k_r, (batch, feature_size), jnp.float32)
    params = init_params(k_p, feature_size, hidden_size)

    # One-time param prep (f32 matmul operands by default -> exact vs. reference;
    # pass mm_dtype=jnp.bfloat16 here to trade a little precision for MXU rate).
    prepped = prepare_params(params, mm_dtype=jnp.float32)

    out = adj_encoder(left_input, right_input, prepped)
    out = jax.block_until_ready(out)

    ref = adj_encoder_ref(left_input, right_input, params)
    assert out.shape == (batch, feature_size)
    assert out.dtype == left_input.dtype
    assert jnp.allclose(out, ref, atol=1e-5, rtol=1e-5), \
        float(jnp.max(jnp.abs(out - ref)))

    print("KERNEL_OK")
</pallas_src>

<mosaic_0001>
module attributes {stable_mosaic.version = 11 : i64} {
  func.func @adj_encoder_kernel(%arg0: i32, %arg1: memref<8x32xf32, #tpu.memory_space<vmem>>, %arg2: memref<8x32xf32, #tpu.memory_space<vmem>>, %arg3: memref<32x64xf32, #tpu.memory_space<vmem>>, %arg4: memref<32x64xf32, #tpu.memory_space<vmem>>, %arg5: memref<1x64xf32, #tpu.memory_space<vmem>>, %arg6: memref<64x32xf32, #tpu.memory_space<vmem>>, %arg7: memref<1x32xf32, #tpu.memory_space<vmem>>, %arg8: memref<8x32xf32, #tpu.memory_space<vmem>>) attributes {dimension_semantics = [#tpu.dimension_semantics<parallel>], iteration_bounds = array<i64: 1>, scalar_prefetch = 0 : i64, scratch_operands = 0 : i64, tpu.core_type = #tpu.core_type<tc>, window_params = [{transform_indices = @transform_0, window_bounds = array<i64: 8, 32>}, {transform_indices = @transform_1, window_bounds = array<i64: 8, 32>}, {pipeline_mode = #tpu.pipeline_mode<synchronous>, transform_indices = @transform_2, window_bounds = array<i64: 32, 64>}, {pipeline_mode = #tpu.pipeline_mode<synchronous>, transform_indices = @transform_3, window_bounds = array<i64: 32, 64>}, {pipeline_mode = #tpu.pipeline_mode<synchronous>, transform_indices = @transform_4, window_bounds = array<i64: 1, 64>}, {pipeline_mode = #tpu.pipeline_mode<synchronous>, transform_indices = @transform_5, window_bounds = array<i64: 64, 32>}, {pipeline_mode = #tpu.pipeline_mode<synchronous>, transform_indices = @transform_6, window_bounds = array<i64: 1, 32>}, {transform_indices = @transform_7, window_bounds = array<i64: 8, 32>}]} {
    %c0 = arith.constant 0 : index
    %c0_0 = arith.constant 0 : index
    %0 = vector.load %arg1[%c0, %c0_0] : memref<8x32xf32, #tpu.memory_space<vmem>>, vector<8x32xf32>
    %c0_1 = arith.constant 0 : index
    %c0_2 = arith.constant 0 : index
    %1 = vector.load %arg2[%c0_1, %c0_2] : memref<8x32xf32, #tpu.memory_space<vmem>>, vector<8x32xf32>
    %c0_3 = arith.constant 0 : index
    %c0_4 = arith.constant 0 : index
    %2 = vector.load %arg3[%c0_3, %c0_4] : memref<32x64xf32, #tpu.memory_space<vmem>>, vector<32x64xf32>
    %cst = arith.constant dense<0.000000e+00> : vector<8x64xf32>
    %3 = tpu.matmul %0, %2, %cst {dimension_numbers = #tpu.dot_dimension_numbers<[1], [0], [0], [1], [0, 0, 1, 1], [], []>} : vector<8x32xf32>, vector<32x64xf32>, vector<8x64xf32> -> vector<8x64xf32>
    %c0_5 = arith.constant 0 : index
    %c0_6 = arith.constant 0 : index
    %4 = vector.load %arg4[%c0_5, %c0_6] : memref<32x64xf32, #tpu.memory_space<vmem>>, vector<32x64xf32>
    %cst_7 = arith.constant dense<0.000000e+00> : vector<8x64xf32>
    %5 = tpu.matmul %1, %4, %cst_7 {dimension_numbers = #tpu.dot_dimension_numbers<[1], [0], [0], [1], [0, 0, 1, 1], [], []>} : vector<8x32xf32>, vector<32x64xf32>, vector<8x64xf32> -> vector<8x64xf32>
    %6 = arith.addf %3, %5 : vector<8x64xf32>
    %c0_8 = arith.constant 0 : index
    %c0_9 = arith.constant 0 : index
    %7 = vector.load %arg5[%c0_8, %c0_9] : memref<1x64xf32, #tpu.memory_space<vmem>>, vector<1x64xf32>
    %8 = vector.broadcast %7 : vector<1x64xf32> to vector<8x64xf32>
    %9 = arith.addf %6, %8 : vector<8x64xf32>
    %10 = math.tanh %9 : vector<8x64xf32>
    %c0_10 = arith.constant 0 : index
    %c0_11 = arith.constant 0 : index
    %11 = vector.load %arg6[%c0_10, %c0_11] : memref<64x32xf32, #tpu.memory_space<vmem>>, vector<64x32xf32>
    %cst_12 = arith.constant dense<0.000000e+00> : vector<8x32xf32>
    %12 = tpu.matmul %10, %11, %cst_12 {dimension_numbers = #tpu.dot_dimension_numbers<[1], [0], [0], [1], [0, 0, 1, 1], [], []>} : vector<8x64xf32>, vector<64x32xf32>, vector<8x32xf32> -> vector<8x32xf32>
    %c0_13 = arith.constant 0 : index
    %c0_14 = arith.constant 0 : index
    %13 = vector.load %arg7[%c0_13, %c0_14] : memref<1x32xf32, #tpu.memory_space<vmem>>, vector<1x32xf32>
    %14 = vector.broadcast %13 : vector<1x32xf32> to vector<8x32xf32>
    %15 = arith.addf %12, %14 : vector<8x32xf32>
    %16 = math.tanh %15 : vector<8x32xf32>
    %c0_15 = arith.constant 0 : index
    %c0_16 = arith.constant 0 : index
    %17 = vector.load %arg8[%c0_15, %c0_16] : memref<8x32xf32, #tpu.memory_space<vmem>>, vector<8x32xf32>
    tpu.vector_store %arg8[%c0_15, %c0_16], %16 {strides = array<i32>} : memref<8x32xf32, #tpu.memory_space<vmem>>, vector<8x32xf32>,
    return
  }
  func.func @transform_0(%arg0: i32) -> (i32, i32) {
    %c0_i32 = arith.constant 0 : i32
    %c0_i32_0 = arith.constant 0 : i32
    return %arg0, %c0_i32 : i32, i32
  }
  func.func @transform_1(%arg0: i32) -> (i32, i32) {
    %c0_i32 = arith.constant 0 : i32
    %c0_i32_0 = arith.constant 0 : i32
    return %arg0, %c0_i32 : i32, i32
  }
  func.func @transform_2(%arg0: i32) -> (i32, i32) {
    %c0_i32 = arith.constant 0 : i32
    %c0_i32_0 = arith.constant 0 : i32
    %c0_i32_1 = arith.constant 0 : i32
    return %c0_i32, %c0_i32_0 : i32, i32
  }
  func.func @transform_3(%arg0: i32) -> (i32, i32) {
    %c0_i32 = arith.constant 0 : i32
    %c0_i32_0 = arith.constant 0 : i32
    %c0_i32_1 = arith.constant 0 : i32
    return %c0_i32, %c0_i32_0 : i32, i32
  }
  func.func @transform_4(%arg0: i32) -> (i32, i32) {
    %c0_i32 = arith.constant 0 : i32
    %c0_i32_0 = arith.constant 0 : i32
    %c0_i32_1 = arith.constant 0 : i32
    return %c0_i32, %c0_i32_0 : i32, i32
  }
  func.func @transform_5(%arg0: i32) -> (i32, i32) {
    %c0_i32 = arith.constant 0 : i32
    %c0_i32_0 = arith.constant 0 : i32
    %c0_i32_1 = arith.constant 0 : i32
    return %c0_i32, %c0_i32_0 : i32, i32
  }
  func.func @transform_6(%arg0: i32) -> (i32, i32) {
    %c0_i32 = arith.constant 0 : i32
    %c0_i32_0 = arith.constant 0 : i32
    %c0_i32_1 = arith.constant 0 : i32
    return %c0_i32, %c0_i32_0 : i32, i32
  }
  func.func @transform_7(%arg0: i32) -> (i32, i32) {
    %c0_i32 = arith.constant 0 : i32
    %c0_i32_0 = arith.constant 0 : i32
    return %arg0, %c0_i32 : i32, i32
  }
}

</mosaic_0001>

<llo_original>
// kernel: tpu_custom_call.1
$region0: #{tpu_custom_call.1}
  #allocation0 [shape = 'u32[]', space=smem, size = 0x4, offset = 0x4, fixed_abs, tag = 'smem constant byte address 0x4 - core index']
  #allocation1 [shape = 'u32[144,128]{1,0:T(1,128)}', space=vmem, size = 0x12000, scoped, tag = 'internal scratch']
  %s0 = inlined_call_operand.vmem [shape: f32[8,32], index: 0, kind: input, shape index: {}]
  %s1 = inlined_call_operand.vmem [shape: f32[8,32], index: 1, kind: input, shape index: {}]
  %s2 = inlined_call_operand.vmem [shape: f32[32,64], index: 2, kind: input, shape index: {}]
  %s3 = inlined_call_operand.vmem [shape: f32[32,64], index: 3, kind: input, shape index: {}]
  %s4 = inlined_call_operand.vmem [shape: f32[1,64], index: 4, kind: input, shape index: {}]
  %s5 = inlined_call_operand.vmem [shape: f32[64,32], index: 5, kind: input, shape index: {}]
  %s6 = inlined_call_operand.vmem [shape: f32[1,32], index: 6, kind: input, shape index: {}]
  %s7 = inlined_call_operand.hbm [shape: f32[8,32], index: 7, kind: output, shape index: {}]
  %s8 = sld [smem:[#allocation0]]
  $region38: #{tpu_custom_call.1} parent=0
    _
  %s10 = ssub.s32 1, %s8
  %s11 = scalar_select 0, %s10, %s8
  $region1: #{tpu_custom_call.1} parent=0
    #allocation2 [shape = 'u8[4096]{0}', space=vmem, size = 0x1000, scoped, tag = 'output window, operand 0, single buffered']
    #allocation3 [shape = 's32[1]{0}', space=sflag, size = 0x4, scoped, tag = 'scoped memory for tpu_custom_call.1']
    %12 = vsyncpa [#allocation3], 0
    // Predicated region
    $region2: #{tpu_custom_call.1} parent=1 // pred_check
      _
    $region3: #{tpu_custom_call.1} parent=1 // pred_check_branch
      %14 = sbr.rel (0) target = $region5
    $region4: #{tpu_custom_call.1} parent=1 // pred_region
      _
    $region5: #{tpu_custom_call.1} parent=1 // pred_fallthru
      _
    // Predicated region
    $region6: #{tpu_custom_call.1} parent=1 // pred_check
      _
    $region7: #{tpu_custom_call.1} parent=1 // pred_check_branch
      %16 = sbr.rel (0) target = $region9
    $region8: #{tpu_custom_call.1} parent=1 // pred_region
      _
    $region9: #{tpu_custom_call.1} parent=1 // pred_fallthru
      _
    // Predicated region
    $region10: #{tpu_custom_call.1} parent=1 // pred_check
      _
    $region11: #{tpu_custom_call.1} parent=1 // pred_check_branch
      %18 = sbr.rel (0) target = $region13
    $region12: #{tpu_custom_call.1} parent=1 // pred_region
      _
    $region13: #{tpu_custom_call.1} parent=1 // pred_fallthru
      _
    // Predicated region
    $region14: #{tpu_custom_call.1} parent=1 // pred_check
      _
    $region15: #{tpu_custom_call.1} parent=1 // pred_check_branch
      %20 = sbr.rel (0) target = $region17
    $region16: #{tpu_custom_call.1} parent=1 // pred_region
      _
    $region17: #{tpu_custom_call.1} parent=1 // pred_fallthru
      _
    // Predicated region
    $region18: #{tpu_custom_call.1} parent=1 // pred_check
      _
    $region19: #{tpu_custom_call.1} parent=1 // pred_check_branch
      %22 = sbr.rel (0) target = $region21
    $region20: #{tpu_custom_call.1} parent=1 // pred_region
      _
    $region21: #{tpu_custom_call.1} parent=1 // pred_fallthru
      _
    // Predicated region
    $region22: #{tpu_custom_call.1} parent=1 // pred_check
      _
    $region23: #{tpu_custom_call.1} parent=1 // pred_check_branch
      %24 = sbr.rel (0) target = $region25
    $region24: #{tpu_custom_call.1} parent=1 // pred_region
      _
    $region25: #{tpu_custom_call.1} parent=1 // pred_fallthru
      _
    // Predicated region
    $region26: #{tpu_custom_call.1} parent=1 // pred_check
      _
    $region27: #{tpu_custom_call.1} parent=1 // pred_check_branch
      %26 = sbr.rel (0) target = $region29
    $region28: #{tpu_custom_call.1} parent=1 // pred_region
      _
    $region29: #{tpu_custom_call.1} parent=1 // pred_fallthru
      _
    %v27 = vld [vmem:[%s0] sm:$0xff]
    %v28 = vld [vmem:[%s1] sm:$0xff]
    %v29 = vld [vmem:[%s2] sm:$0xff]
    %v30 = vld [vmem:[%s2 + $0x8] sm:$0xff]
    %v31 = vld [vmem:[%s2 + $0x10] sm:$0xff]
    %v32 = vld [vmem:[%s2 + $0x18] sm:$0xff]
    %v33 = vld [vmem:[%s3] sm:$0xff]
    %v34 = vld [vmem:[%s3 + $0x8] sm:$0xff]
    %v35 = vld [vmem:[%s3 + $0x10] sm:$0xff]
    %v36 = vld [vmem:[%s3 + $0x18] sm:$0xff]
    %vm37 = vcmask 261120
    %v39 = vsel %vm37, %v28, 0
    %41 = vmatprep.subr.mxu0 0.0
    %42 = vmatpush1.msra.mxu0 %v33
    %43 = vmatprep.subr.mxu0 0.0
    %44 = vmatpush1.msra.mxu0 %v34
    %45 = vmatprep.subr.mxu0 0.0
    %46 = vmatpush1.msra.mxu0 %v35
    %47 = vmatprep.subr.mxu0 0.0
    %48 = vmatpush1.msra.mxu0 %v36
    %49 = vmatprep.subr.mxu0 0.0
    %50 = vmatpush1.msra.mxu0 0.0
    %51 = vmatprep.subr.mxu0 0.0
    %52 = vmatpush1.msra.mxu0 0.0
    %53 = vmatprep.subr.mxu0 0.0
    %54 = vmatpush1.msra.mxu0 0.0
    %55 = vmatprep.subr.mxu0 0.0
    %56 = vmatpush1.msra.mxu0 0.0
    %57 = vmatprep.subr.mxu0 0.0
    %58 = vmatpush1.msra.mxu0 0.0
    %59 = vmatprep.subr.mxu0 0.0
    %60 = vmatpush1.msra.mxu0 0.0
    %61 = vmatprep.subr.mxu0 0.0
    %62 = vmatpush1.msra.mxu0 0.0
    %63 = vmatprep.subr.mxu0 0.0
    %64 = vmatpush1.msra.mxu0 0.0
    %65 = vmatprep.subr.mxu0 0.0
    %66 = vmatpush1.msra.mxu0 0.0
    %67 = vmatprep.subr.mxu0 0.0
    %68 = vmatpush1.msra.mxu0 0.0
    %69 = vmatprep.subr.mxu0 0.0
    %70 = vmatpush1.msra.mxu0 0.0
    %71 = vmatprep.subr.mxu0 0.0
    %72 = vmatpush1.msra.mxu0 0.0
    %73 = vmatprep.subr.mxu0 0.0
    %74 = vmatpush1.msra.mxu0 0.0
    %75 = vmatprep.subr.mxu0 0.0
    %76 = vmatpush1.msra.mxu0 0.0
    %77 = vmatprep.subr.mxu0 0.0
    %78 = vmatpush1.msra.mxu0 0.0
    %79 = vmatprep.subr.mxu0 0.0
    %80 = vmatpush1.msra.mxu0 0.0
    %81 = vmatprep.subr.mxu0 0.0
    %82 = vmatpush1.msra.mxu0 0.0
    %83 = vmatprep.subr.mxu0 0.0
    %84 = vmatpush1.msra.mxu0 0.0
    %85 = vmatprep.subr.mxu0 0.0
    %86 = vmatpush1.msra.mxu0 0.0
    %87 = vmatprep.subr.mxu0 0.0
    %88 = vmatpush1.msra.mxu0 0.0
    %89 = vmatprep.subr.mxu0 0.0
    %90 = vmatpush1.msra.mxu0 0.0
    %91 = vmatprep.subr.mxu0 0.0
    %92 = vmatpush1.msra.mxu0 0.0
    %93 = vmatprep.subr.mxu0 0.0
    %94 = vmatpush1.msra.mxu0 0.0
    %95 = vmatprep.subr.mxu0 0.0
    %96 = vmatpush1.msra.mxu0 0.0
    %97 = vmatprep.subr.mxu0 0.0
    %98 = vmatpush1.msra.mxu0 0.0
    %99 = vmatprep.subr.mxu0 0.0
    %100 = vmatpush1.msra.mxu0 0.0
    %101 = vmatprep.subr.mxu0 0.0
    %102 = vmatpush1.msra.mxu0 0.0
    %103 = vmatprep.subr.mxu0 0.0
    %104 = vmatpush1.msra.mxu0 0.0
    %105 = vmatprep.mubr.f32.mxu0 0.0
    %106 = vmatmul.mubr.f32.gmra.mrb[0].mxu0 %v39
    %v107 = vpop.f32.mrb[0].mxu0
    %v108 = vadd.f32 0.0, %v107
    %v109 = vpop.f32.mrb[0].mxu0
    %110 = vdwg.mxu0
    %v112 = vsel %vm37, %v27, 0
    %114 = vmatprep.subr.mxu0 0.0
    %115 = vmatpush1.msra.mxu0 %v29
    %116 = vmatprep.subr.mxu0 0.0
    %117 = vmatpush1.msra.mxu0 %v30
    %118 = vmatprep.subr.mxu0 0.0
    %119 = vmatpush1.msra.mxu0 %v31
    %120 = vmatprep.subr.mxu0 0.0
    %121 = vmatpush1.msra.mxu0 %v32
    %122 = vmatprep.subr.mxu0 0.0
    %123 = vmatpush1.msra.mxu0 0.0
    %124 = vmatprep.subr.mxu0 0.0
    %125 = vmatpush1.msra.mxu0 0.0
    %126 = vmatprep.subr.mxu0 0.0
    %127 = vmatpush1.msra.mxu0 0.0
    %128 = vmatprep.subr.mxu0 0.0
    %129 = vmatpush1.msra.mxu0 0.0
    %130 = vmatprep.subr.mxu0 0.0
    %131 = vmatpush1.msra.mxu0 0.0
    %132 = vmatprep.subr.mxu0 0.0
    %133 = vmatpush1.msra.mxu0 0.0
    %134 = vmatprep.subr.mxu0 0.0
    %135 = vmatpush1.msra.mxu0 0.0
    %136 = vmatprep.subr.mxu0 0.0
    %137 = vmatpush1.msra.mxu0 0.0
    %138 = vmatprep.subr.mxu0 0.0
    %139 = vmatpush1.msra.mxu0 0.0
    %140 = vmatprep.subr.mxu0 0.0
    %141 = vmatpush1.msra.mxu0 0.0
    %142 = vmatprep.subr.mxu0 0.0
    %143 = vmatpush1.msra.mxu0 0.0
    %144 = vmatprep.subr.mxu0 0.0
    %145 = vmatpush1.msra.mxu0 0.0
    %146 = vmatprep.subr.mxu0 0.0
    %147 = vmatpush1.msra.mxu0 0.0
    %148 = vmatprep.subr.mxu0 0.0
    %149 = vmatpush1.msra.mxu0 0.0
    %150 = vmatprep.subr.mxu0 0.0
    %151 = vmatpush1.msra.mxu0 0.0
    %152 = vmatprep.subr.mxu0 0.0
    %153 = vmatpush1.msra.mxu0 0.0
    %154 = vmatprep.subr.mxu0 0.0
    %155 = vmatpush1.msra.mxu0 0.0
    %156 = vmatprep.subr.mxu0 0.0
    %157 = vmatpush1.msra.mxu0 0.0
    %158 = vmatprep.subr.mxu0 0.0
    %159 = vmatpush1.msra.mxu0 0.0
    %160 = vmatprep.subr.mxu0 0.0
    %161 = vmatpush1.msra.mxu0 0.0
    %162 = vmatprep.subr.mxu0 0.0
    %163 = vmatpush1.msra.mxu0 0.0
    %164 = vmatprep.subr.mxu0 0.0
    %165 = vmatpush1.msra.mxu0 0.0
    %166 = vmatprep.subr.mxu0 0.0
    %167 = vmatpush1.msra.mxu0 0.0
    %168 = vmatprep.subr.mxu0 0.0
    %169 = vmatpush1.msra.mxu0 0.0
    %170 = vmatprep.subr.mxu0 0.0
    %171 = vmatpush1.msra.mxu0 0.0
    %172 = vmatprep.subr.mxu0 0.0
    %173 = vmatpush1.msra.mxu0 0.0
    %174 = vmatprep.subr.mxu0 0.0
    %175 = vmatpush1.msra.mxu0 0.0
    %176 = vmatprep.subr.mxu0 0.0
    %177 = vmatpush1.msra.mxu0 0.0
    %178 = vmatprep.mubr.f32.mxu0 0.0
    %179 = vmatmul.mubr.f32.gmra.mrb[0].mxu0 %v112
    %v180 = vpop.f32.mrb[0].mxu0
    %v181 = vadd.f32 %v108, %v180
    %v182 = vpop.f32.mrb[0].mxu0
    %183 = vdwg.mxu0
    %v184 = vld [vmem:[%s4] sm:$0x1]
    %v186 = vlaneseq
    %v187 = vshrl.u32 %v186, 7
    %v188 = vsub.s32 0, %v187
    %v189 = vrot.slane %v184, %v188
    %v191 = vadd.f32 %v181, %v189
    %v192 = vtanh.pop %v191
    %v193 = vld [vmem:[%s5] sm:$0xff]
    %v194 = vld [vmem:[%s5 + $0x8] sm:$0xff]
    %v195 = vld [vmem:[%s5 + $0x10] sm:$0xff]
    %v196 = vld [vmem:[%s5 + $0x18] sm:$0xff]
    %v197 = vld [vmem:[%s5 + $0x20] sm:$0xff]
    %v198 = vld [vmem:[%s5 + $0x28] sm:$0xff]
    %v199 = vld [vmem:[%s5 + $0x30] sm:$0xff]
    %v200 = vld [vmem:[%s5 + $0x38] sm:$0xff]
    %v201 = vld [vmem:[%s6] sm:$0x1]
    %v203 = vlaneseq
    %v204 = vshrl.u32 %v203, 7
    %v205 = vsub.s32 0, %v204
    %v206 = vrot.slane %v201, %v205
    %vm208 = vcmask 523264
    %v210 = vsel %vm208, %v192, 0
    %212 = vmatprep.subr.mxu0 0.0
    %213 = vmatpush1.msra.mxu0 %v193
    %214 = vmatprep.subr.mxu0 0.0
    %215 = vmatpush1.msra.mxu0 %v194
    %216 = vmatprep.subr.mxu0 0.0
    %217 = vmatpush1.msra.mxu0 %v195
    %218 = vmatprep.subr.mxu0 0.0
    %219 = vmatpush1.msra.mxu0 %v196
    %220 = vmatprep.subr.mxu0 0.0
    %221 = vmatpush1.msra.mxu0 %v197
    %222 = vmatprep.subr.mxu0 0.0
    %223 = vmatpush1.msra.mxu0 %v198
    %224 = vmatprep.subr.mxu0 0.0
    %225 = vmatpush1.msra.mxu0 %v199
    %226 = vmatprep.subr.mxu0 0.0
    %227 = vmatpush1.msra.mxu0 %v200
    %228 = vmatprep.subr.mxu0 0.0
    %229 = vmatpush1.msra.mxu0 0.0
    %230 = vmatprep.subr.mxu0 0.0
    %231 = vmatpush1.msra.mxu0 0.0
    %232 = vmatprep.subr.mxu0 0.0
    %233 = vmatpush1.msra.mxu0 0.0
    %234 = vmatprep.subr.mxu0 0.0
    %235 = vmatpush1.msra.mxu0 0.0
    %236 = vmatprep.subr.mxu0 0.0
    %237 = vmatpush1.msra.mxu0 0.0
    %238 = vmatprep.subr.mxu0 0.0
    %239 = vmatpush1.msra.mxu0 0.0
    %240 = vmatprep.subr.mxu0 0.0
    %241 = vmatpush1.msra.mxu0 0.0
    %242 = vmatprep.subr.mxu0 0.0
    %243 = vmatpush1.msra.mxu0 0.0
    %244 = vmatprep.subr.mxu0 0.0
    %245 = vmatpush1.msra.mxu0 0.0
    %246 = vmatprep.subr.mxu0 0.0
    %247 = vmatpush1.msra.mxu0 0.0
    %248 = vmatprep.subr.mxu0 0.0
    %249 = vmatpush1.msra.mxu0 0.0
    %250 = vmatprep.subr.mxu0 0.0
    %251 = vmatpush1.msra.mxu0 0.0
    %252 = vmatprep.subr.mxu0 0.0
    %253 = vmatpush1.msra.mxu0 0.0
    %254 = vmatprep.subr.mxu0 0.0
    %255 = vmatpush1.msra.mxu0 0.0
    %256 = vmatprep.subr.mxu0 0.0
    %257 = vmatpush1.msra.mxu0 0.0
    %258 = vmatprep.subr.mxu0 0.0
    %259 = vmatpush1.msra.mxu0 0.0
    %260 = vmatprep.subr.mxu0 0.0
    %261 = vmatpush1.msra.mxu0 0.0
    %262 = vmatprep.subr.mxu0 0.0
    %263 = vmatpush1.msra.mxu0 0.0
    %264 = vmatprep.subr.mxu0 0.0
    %265 = vmatpush1.msra.mxu0 0.0
    %266 = vmatprep.subr.mxu0 0.0
    %267 = vmatpush1.msra.mxu0 0.0
    %268 = vmatprep.subr.mxu0 0.0
    %269 = vmatpush1.msra.mxu0 0.0
    %270 = vmatprep.subr.mxu0 0.0
    %271 = vmatpush1.msra.mxu0 0.0
    %272 = vmatprep.subr.mxu0 0.0
    %273 = vmatpush1.msra.mxu0 0.0
    %274 = vmatprep.subr.mxu0 0.0
    %275 = vmatpush1.msra.mxu0 0.0
    %276 = vmatprep.mubr.f32.mxu0 0.0
    %277 = vmatmul.mubr.f32.gmra.mrb[0].mxu0 %v210
    %v278 = vpop.f32.mrb[0].mxu0
    %v279 = vadd.f32 %v206, %v278
    %v280 = vpop.f32.mrb[0].mxu0
    %281 = vdwg.mxu0
    %v282 = vtanh.pop %v279
    %283 = vst.msk [vmem:[#allocation2] sm:$0xff] %vm37, %v282
    // Predicated region
    $region30: #{tpu_custom_call.1} parent=1 // pred_check
      _
    $region31: #{tpu_custom_call.1} parent=1 // pred_check_branch
      %285 = sbr.rel (0) target = $region33
    $region32: #{tpu_custom_call.1} parent=1 // pred_region
      %s287 = ssub.s32 128, 128
      %288 = vsyncadd [#allocation3], %s287
      %s290 = sshll.u32 [#allocation2], 4
      %s291 = int_to_ptr.vmem [resolvable:$true] %s290
      %293 = dma.vmem_to_hbm [thread:$0]  %s291, 128, %s7, [#allocation3]
    $region33: #{tpu_custom_call.1} parent=1 // pred_fallthru
      _
    // Predicated region
    $region34: #{tpu_custom_call.1} parent=1 // pred_check
      _
    $region35: #{tpu_custom_call.1} parent=1 // pred_check_branch
      %295 = sbr.rel (0) target = $region37
    $region36: #{tpu_custom_call.1} parent=1 // pred_region
      %296 = dma.done [#allocation3], 128
    $region37: #{tpu_custom_call.1} parent=1 // pred_fallthru
      _
    %297 = vsyncpa [#allocation3], 1

</llo_original>
